<compile_context>
chip_gen: v6e
topology: v6e:2x2x1
jax: 0.10.0
libtpu: 0.0.40
codegen_flags: <defaults>
</compile_context>

<pallas_src>
import jax
import jax.numpy as jnp
from jax.experimental import pallas as pl
from jax.experimental.pallas import tpu as pltpu


def _round_up(n, m):
    return ((n + m - 1) // m) * m


def _choose_tokens_per_step(N, D, Vp, target):
    """Pick the token tile T (multiple of 8) and the (possibly padded) N.

    Preference order:
      1. T divides N (no input pad, no post-kernel slice) AND N // T >= 2
         (so megacore / v7x can split the grid axis across both TensorCores),
      2. T divides N (single grid step),
      3. fall back to padding the token axis (post-kernel slice removes tail).
    T is additionally capped so per-step VMEM (output double-buffer + one-hot
    + f32 rows) stays well inside the default scoped-VMEM limit on every chip.
    """
    bytes_per_token = 4 * (3 * D + Vp)            # 2x out bufs + rows + one-hot
    vmem_cap = max(8, ((20 << 20) // bytes_per_token) // 8 * 8)
    target = max(8, min(_round_up(target, 8), vmem_cap))

    divisors = [t for t in range(8, min(target, N) + 1, 8) if N % t == 0]
    if divisors:
        multi_step = [t for t in divisors if N // t >= 2]
        T = max(multi_step) if multi_step else max(divisors)
        return T, N
    T = min(target, _round_up(N, 8))
    return T, _round_up(N, T)


def _masked_embedding_kernel(ids_ref, mask_ref, table_ref, out_ref):
    """ids (T,1) i32, mask (T,1) f32, table (Vp,D) f32 -> out (T,D) f32.

    Builds a mask-scaled selection matrix (row t has masks[t] at column
    ids[t], zero elsewhere) and gathers rows with one MXU matmul.
    """
    T = out_ref.shape[0]
    Vp = table_ref.shape[0]
    ids = ids_ref[...]                                            # (T, 1) i32
    lane = jax.lax.broadcasted_iota(jnp.int32, (T, Vp), 1)        # cheap VPU op
    # Mask folded into the one-hot: select mask value where lane == id.
    # Out-of-range ids (including padded-vocab columns) yield an all-zero row.
    sel = jnp.where(lane == ids, mask_ref[...], 0.0).astype(table_ref.dtype)
    # MXU gather: (T, Vp) @ (Vp, D). HIGHEST precision keeps f32 rows exact
    # (default precision bf16-rounds the operands).
    rows = jnp.dot(sel, table_ref[...],
                   preferred_element_type=jnp.float32,
                   precision=jax.lax.Precision.HIGHEST)           # (T, D) f32
    out_ref[...] = rows.astype(out_ref.dtype)


def masked_embedding(x, masks, emb_table, *, tokens_per_step=2048):
    """x: (B,S) int ids; masks: (B,S); emb_table: (V,D) f32 -> (B,S,D) f32.

    Computes masks[..., None] * emb_table[x] with a single Pallas kernel: the
    (zero-padded to Vp=ceil(V/128)*128) table is VMEM-resident for the whole
    call, T tokens are gathered per grid step via a masked one-hot MXU matmul.
    """
    B, S = x.shape
    V, D = emb_table.shape
    N = B * S

    # Pad the contraction (vocab) axis to a lane-dense multiple of 128.
    Vp = max(128, _round_up(V, 128))
    if Vp != V:
        emb_table = jnp.pad(emb_table, ((0, Vp - V), (0, 0)))

    T, N_pad = _choose_tokens_per_step(N, D, Vp, tokens_per_step)

    ids = x.reshape(N).astype(jnp.int32)
    m = masks.reshape(N).astype(emb_table.dtype)
    if N_pad != N:
        ids = jnp.pad(ids, (0, N_pad - N))        # pad with a valid id (0)
        m = jnp.pad(m, (0, N_pad - N))            # pad mask with 0
    ids = ids.reshape(N_pad, 1)
    m = m.reshape(N_pad, 1)

    out_flat = pl.pallas_call(
        _masked_embedding_kernel,
        out_shape=jax.ShapeDtypeStruct((N_pad, D), emb_table.dtype),
        grid_spec=pltpu.PrefetchScalarGridSpec(
            num_scalar_prefetch=0,
            grid=(N_pad // T,),
            in_specs=[
                # T token ids per step (sublane axis = T, lane axis = 1 = full).
                pl.BlockSpec((T, 1), lambda i: (i, 0)),
                # matching mask tile
                pl.BlockSpec((T, 1), lambda i: (i, 0)),
                # whole (lane-padded) embedding table; constant block index ->
                # DMA'd once, stays VMEM-resident across all grid steps.
                # (Single-buffering it would save Vp*D*4 bytes; negligible at
                #  this size, so we keep the default to avoid API risk.)
                pl.BlockSpec((Vp, D), lambda i: (0, 0)),
            ],
            # sublane/lane-dense (T, D) output tile -> unmasked full-tile vst.
            out_specs=pl.BlockSpec((T, D), lambda i: (i, 0)),
        ),
        compiler_params=pltpu.CompilerParams(
            # embarrassingly parallel over token tiles (no accumulator):
            # shards across both TensorCores on v7x, neutral on v5e/v6e.
            dimension_semantics=("parallel",)),
    )(ids, m, emb_table)

    if N_pad != N:
        # Only hit when no multiple-of-8 divisor of N <= target exists.
        out_flat = out_flat[:N]
    return out_flat.reshape(B, S, D)


if __name__ == "__main__":
    key = jax.random.PRNGKey(0)
    k_emb, k_ids, k_mask = jax.random.split(key, 3)

    vocab_size = 64
    embedding_dim = 128
    batch_size, seq_length = 2, 8

    # Deterministic "frozen" embedding weights (requires_grad=False in torch
    # only affects training; the forward is a pure gather).
    emb_table = jax.random.normal(
        k_emb, (vocab_size, embedding_dim), dtype=jnp.float32)
    x = jax.random.randint(
        k_ids, (batch_size, seq_length), 0, vocab_size, dtype=jnp.int32)
    masks = (jax.random.uniform(k_mask, (batch_size, seq_length)) > 0.2
             ).astype(jnp.float32)

    y = masked_embedding(x, masks, emb_table)
    y = jax.block_until_ready(y)

    # Reference: masks_ * nn.Embedding(vocab, D)(x)  ==  masks[...,None]*table[x]
    ref = masks[..., None] * emb_table[x]
    assert y.shape == (batch_size, seq_length, embedding_dim)
    assert y.dtype == jnp.float32
    assert jnp.allclose(y, ref), float(jnp.max(jnp.abs(y - ref)))

    print("KERNEL_OK")
</pallas_src>

<mosaic_0001>
module attributes {stable_mosaic.version = 11 : i64} {
  func.func @_masked_embedding_kernel(%arg0: i32, %arg1: memref<8x1xi32, #tpu.memory_space<vmem>>, %arg2: memref<8x1xf32, #tpu.memory_space<vmem>>, %arg3: memref<128x128xf32, #tpu.memory_space<vmem>>, %arg4: memref<8x128xf32, #tpu.memory_space<vmem>>) attributes {dimension_semantics = [#tpu.dimension_semantics<parallel>], iteration_bounds = array<i64: 2>, scalar_prefetch = 0 : i64, scratch_operands = 0 : i64, tpu.core_type = #tpu.core_type<tc>, window_params = [{transform_indices = @transform_0, window_bounds = array<i64: 8, 1>}, {transform_indices = @transform_1, window_bounds = array<i64: 8, 1>}, {pipeline_mode = #tpu.pipeline_mode<synchronous>, transform_indices = @transform_2, window_bounds = array<i64: 128, 128>}, {transform_indices = @transform_3, window_bounds = array<i64: 8, 128>}]} {
    %c0 = arith.constant 0 : index
    %c0_0 = arith.constant 0 : index
    %0 = vector.load %arg1[%c0, %c0_0] : memref<8x1xi32, #tpu.memory_space<vmem>>, vector<8x1xi32>
    %1 = tpu.iota {dimensions = array<i32: 1>} : vector<8x128xi32>
    %2 = vector.broadcast %0 : vector<8x1xi32> to vector<8x128xi32>
    %3 = arith.cmpi eq, %1, %2 : vector<8x128xi32>
    %c0_1 = arith.constant 0 : index
    %c0_2 = arith.constant 0 : index
    %4 = vector.load %arg2[%c0_1, %c0_2] : memref<8x1xf32, #tpu.memory_space<vmem>>, vector<8x1xf32>
    %cst = arith.constant 0.000000e+00 : f32
    %5 = vector.shape_cast %4 : vector<8x1xf32> to vector<8x1xf32>
    %6 = vector.broadcast %5 : vector<8x1xf32> to vector<8x128xf32>
    %7 = vector.broadcast %cst : f32 to vector<8x128xf32>
    %8 = arith.select %3, %6, %7 : vector<8x128xi1>, vector<8x128xf32>
    %c0_3 = arith.constant 0 : index
    %c0_4 = arith.constant 0 : index
    %9 = vector.load %arg3[%c0_3, %c0_4] : memref<128x128xf32, #tpu.memory_space<vmem>>, vector<128x128xf32>
    %cst_5 = arith.constant dense<0.000000e+00> : vector<8x128xf32>
    %10 = tpu.matmul %8, %9, %cst_5 {dimension_numbers = #tpu.dot_dimension_numbers<[1], [0], [0], [1], [0, 0, 1, 1], [], []>, precision = #tpu.contract_precision<fp32>} : vector<8x128xf32>, vector<128x128xf32>, vector<8x128xf32> -> vector<8x128xf32>
    %c0_6 = arith.constant 0 : index
    %c0_7 = arith.constant 0 : index
    %11 = vector.load %arg4[%c0_6, %c0_7] : memref<8x128xf32, #tpu.memory_space<vmem>>, vector<8x128xf32>
    tpu.vector_store %arg4[%c0_6, %c0_7], %10 {strides = array<i32>} : memref<8x128xf32, #tpu.memory_space<vmem>>, vector<8x128xf32>,
    return
  }
  func.func @transform_0(%arg0: i32) -> (i32, i32) {
    %c0_i32 = arith.constant 0 : i32
    %c0_i32_0 = arith.constant 0 : i32
    return %arg0, %c0_i32 : i32, i32
  }
  func.func @transform_1(%arg0: i32) -> (i32, i32) {
    %c0_i32 = arith.constant 0 : i32
    %c0_i32_0 = arith.constant 0 : i32
    return %arg0, %c0_i32 : i32, i32
  }
  func.func @transform_2(%arg0: i32) -> (i32, i32) {
    %c0_i32 = arith.constant 0 : i32
    %c0_i32_0 = arith.constant 0 : i32
    %c0_i32_1 = arith.constant 0 : i32
    return %c0_i32, %c0_i32_0 : i32, i32
  }
  func.func @transform_3(%arg0: i32) -> (i32, i32) {
    %c0_i32 = arith.constant 0 : i32
    %c0_i32_0 = arith.constant 0 : i32
    return %arg0, %c0_i32 : i32, i32
  }
}

</mosaic_0001>

<llo_original>
// kernel: tpu_custom_call.1
$region0: #{tpu_custom_call.1}
  #allocation0 [shape = 'u32[]', space=smem, size = 0x4, offset = 0x4, fixed_abs, tag = 'smem constant byte address 0x4 - core index']
  #allocation1 [shape = 'u32[144,128]{1,0:T(1,128)}', space=vmem, size = 0x12000, scoped, tag = 'internal scratch']
  %s0 = inlined_call_operand.vmem [shape: s32[16,1], index: 0, kind: input, shape index: {}]
  %s1 = inlined_call_operand.vmem [shape: f32[16,1], index: 1, kind: input, shape index: {}]
  %s2 = inlined_call_operand.hbm [shape: f32[128,128], index: 2, kind: input, shape index: {}]
  %s3 = inlined_call_operand.hbm [shape: f32[16,128], index: 3, kind: output, shape index: {}]
  %s4 = sld [smem:[#allocation0]]
  $region49: #{tpu_custom_call.1} parent=0
    _
  %s6 = ssub.s32 1, %s4
  %s7 = scalar_select 0, %s6, %s4
  $region1: #{tpu_custom_call.1} parent=0
    #allocation2 [shape = 'u8[65536]{0}', space=vmem, size = 0x10000, scoped, tag = 'input window, operand 2, single buffered']
    #allocation3 [shape = 's32[2]{0}', space=sflag, size = 0x8, scoped, tag = 'scoped memory for tpu_custom_call.1']
    #allocation4 [shape = 's32[2]{0}', space=sflag, size = 0x8, scoped, tag = 'scoped memory for tpu_custom_call.1']
    #allocation5 [shape = 'u8[8192]{0}', space=vmem, size = 0x2000, scoped, tag = 'output window, operand 0']
    %8 = vsyncpa [#allocation3], 0
    %9 = vsyncpa [#allocation4], 0
    %s10 = scalar_lea.sflag [#allocation4], 1
    %11 = vsyncpa %s10, 0
    loop: start=0, step=1, limit=4
    $region2: #{tpu_custom_call.1} parent=1 // loop_pre_header
      _
    $region3: #{tpu_custom_call.1} parent=1 // loop_header
      %s13 = sphi 0, %s17
      %p14 = scmp.ge.s32.totalorder %s13, 4
      %s23 = sphi 0, %s25
      %s26 = sphi 0, %s23
      %s27 = sphi 0, %s26
      %s43 = sphi 0, %s27
      %s49 = sphi 0, %s51
      %s52 = sphi 0, %s49
      %s53 = sphi 0, %s52
      %s69 = sphi 0, %s53
      %s73 = sphi 0, %s73
      %s75 = sphi 0, %s73
      %s76 = sphi 0, %s75
      %s90 = sphi 0, %s76
      %s96 = sphi 0, %s98
      %s99 = sphi 0, %s96
      %s100 = sphi 0, %s99
      %s116 = sphi 0, %s100
    $region4: #{tpu_custom_call.1} parent=1 // loop_header_branch
      %16 = sbr.rel (%p14) target = $region8
    $region5: #{tpu_custom_call.1} parent=1 // loop_body
      %s18 = ssub.s32 %s13, 1
      %s19 = ssub.s32 %s13, 2
      %s20 = sadd.s32 %s13, 1
      %s21 = ssub.s32 %s13, %s20
      %p22 = scmp.eq.s32.totalorder %s21, 0
      %s24 = sadd.s32 %s23, 1
      %s25 = scalar_select %p22, %s23, %s24
      %p28 = pneg %p22
      %p29 = scmp.eq.s32.totalorder %s13, 1
      %p30 = por %p28, %p29
      %p31 = scmp.ne.s32.totalorder %s23, %s26
      %p32 = scmp.eq.s32.totalorder %s13, 0
      %p33 = por %p31, %p32
      %p34 = scmp.ne.s32.totalorder %s23, %s26
      %p35 = scmp.eq.s32.totalorder %s18, 1
      %p36 = por %p34, %p35
      %p37 = scmp.ne.s32.totalorder %s26, %s27
      %p38 = scmp.eq.s32.totalorder %s18, 0
      %p39 = por %p37, %p38
      %p40 = scmp.ne.s32.totalorder %s26, %s27
      %p41 = scmp.eq.s32.totalorder %s19, 1
      %p42 = por %p40, %p41
      %p44 = scmp.ne.s32.totalorder %s27, %s43
      %p45 = scmp.eq.s32.totalorder %s19, 0
      %p46 = por %p44, %p45
      %s47 = ssub.s32 %s13, %s20
      %p48 = scmp.eq.s32.totalorder %s47, 0
      %s50 = sadd.s32 %s49, 1
      %s51 = scalar_select %p48, %s49, %s50
      %p54 = pneg %p48
      %p55 = scmp.eq.s32.totalorder %s13, 1
      %p56 = por %p54, %p55
      %p57 = scmp.ne.s32.totalorder %s49, %s52
      %p58 = scmp.eq.s32.totalorder %s13, 0
      %p59 = por %p57, %p58
      %p60 = scmp.ne.s32.totalorder %s49, %s52
      %p61 = scmp.eq.s32.totalorder %s18, 1
      %p62 = por %p60, %p61
      %p63 = scmp.ne.s32.totalorder %s52, %s53
      %p64 = scmp.eq.s32.totalorder %s18, 0
      %p65 = por %p63, %p64
      %p66 = scmp.ne.s32.totalorder %s52, %s53
      %p67 = scmp.eq.s32.totalorder %s19, 1
      %p68 = por %p66, %p67
      %p70 = scmp.ne.s32.totalorder %s53, %s69
      %p71 = scmp.eq.s32.totalorder %s19, 0
      %p72 = por %p70, %p71
      %s74 = sadd.s32 %s73, 1
      %p77 = scmp.eq.s32.totalorder %s13, 1
      %p78 = scmp.ne.s32.totalorder %s73, %s75
      %p79 = scmp.eq.s32.totalorder %s13, 0
      %p80 = por %p78, %p79
      %p81 = scmp.ne.s32.totalorder %s73, %s75
      %p82 = scmp.eq.s32.totalorder %s18, 1
      %p83 = por %p81, %p82
      %p84 = scmp.ne.s32.totalorder %s75, %s76
      %p85 = scmp.eq.s32.totalorder %s18, 0
      %p86 = por %p84, %p85
      %p87 = scmp.ne.s32.totalorder %s75, %s76
      %p88 = scmp.eq.s32.totalorder %s19, 1
      %p89 = por %p87, %p88
      %p91 = scmp.ne.s32.totalorder %s76, %s90
      %p92 = scmp.eq.s32.totalorder %s19, 0
      %p93 = por %p91, %p92
      %s94 = ssub.s32 %s13, %s20
      %p95 = scmp.eq.s32.totalorder %s94, 0
      %s97 = sadd.s32 %s96, 1
      %s98 = scalar_select %p95, %s96, %s97
      %p101 = pneg %p95
      %p102 = scmp.eq.s32.totalorder %s13, 1
      %p103 = por %p101, %p102
      %p104 = scmp.ne.s32.totalorder %s96, %s99
      %p105 = scmp.eq.s32.totalorder %s13, 0
      %p106 = por %p104, %p105
      %p107 = scmp.ne.s32.totalorder %s96, %s99
      %p108 = scmp.eq.s32.totalorder %s18, 1
      %p109 = por %p107, %p108
      %p110 = scmp.ne.s32.totalorder %s99, %s100
      %p111 = scmp.eq.s32.totalorder %s18, 0
      %p112 = por %p110, %p111
      %p113 = scmp.ne.s32.totalorder %s99, %s100
      %p114 = scmp.eq.s32.totalorder %s19, 1
      %p115 = por %p113, %p114
      %p117 = scmp.ne.s32.totalorder %s100, %s116
      %p118 = scmp.eq.s32.totalorder %s19, 0
      %p119 = por %p117, %p118
      %p120 = scmp.le.s32.totalorder 1, %s13
      %p121 = scmp.lt.s32.totalorder %s13, 3
      %p122 = pnand %p120, %p121
      %p123 = pneg %p122
      // Predicated region
      $region9: #{tpu_custom_call.1} parent=5 // pred_check
        _
      $region10: #{tpu_custom_call.1} parent=5 // pred_check_branch
        %125 = sbr.rel (%p122) target = $region12
      $region11: #{tpu_custom_call.1} parent=5 // pred_region
        %s126 = ssub.s32 %s13, 1
        // Predicated region
        $region13: #{tpu_custom_call.1} parent=11 // pred_check
          %p127 = pneg %p86
        $region14: #{tpu_custom_call.1} parent=11 // pred_check_branch
          %129 = sbr.rel (%p127) target = $region16
        $region15: #{tpu_custom_call.1} parent=11 // pred_region
          %s131 = ssub.s32 2048, 2048
          %132 = vsyncadd [#allocation3], %s131
          %s133 = sshll.u32 [#allocation2], 4
          %s134 = int_to_ptr.vmem [resolvable:$true] %s133
          %139 = dma.hbm_to_vmem [thread:$0]  %s2, 2048, %s134, [#allocation3], 128, 128, 8
        $region16: #{tpu_custom_call.1} parent=11 // pred_fallthru
          _
      $region12: #{tpu_custom_call.1} parent=5 // pred_fallthru
        _
      %p140 = scmp.lt.s32.totalorder %s13, 2
      // Predicated region
      $region17: #{tpu_custom_call.1} parent=5 // pred_check
        %p141 = pneg %p140
      $region18: #{tpu_custom_call.1} parent=5 // pred_check_branch
        %143 = sbr.rel (%p141) target = $region20
      $region19: #{tpu_custom_call.1} parent=5 // pred_region
        // Predicated region
        $region21: #{tpu_custom_call.1} parent=19 // pred_check
          %p144 = pneg %p33
        $region22: #{tpu_custom_call.1} parent=19 // pred_check_branch
          %146 = sbr.rel (%p144) target = $region24
        $region23: #{tpu_custom_call.1} parent=19 // pred_region
          %p147 = scmp.lt.s32.totalorder %s13, 1
          %s148 = scalar_select %p147, %s13, 1
          %s149 = smul.addr %s148, 8
          %s150 = scalar_lea.vmem %s0, %s149
        $region24: #{tpu_custom_call.1} parent=19 // pred_fallthru
          _
        // Predicated region
        $region25: #{tpu_custom_call.1} parent=19 // pred_check
          %p151 = pneg %p59
        $region26: #{tpu_custom_call.1} parent=19 // pred_check_branch
          %153 = sbr.rel (%p151) target = $region28
        $region27: #{tpu_custom_call.1} parent=19 // pred_region
          %p154 = scmp.lt.s32.totalorder %s13, 1
          %s155 = scalar_select %p154, %s13, 1
          %s156 = smul.addr %s155, 8
          %s157 = scalar_lea.vmem %s1, %s156
        $region28: #{tpu_custom_call.1} parent=19 // pred_fallthru
          _
      $region20: #{tpu_custom_call.1} parent=5 // pred_fallthru
        _
      %p158 = scmp.le.s32.totalorder 1, %s13
      %p159 = scmp.lt.s32.totalorder %s13, 3
      %p160 = pnand %p158, %p159
      %p161 = pneg %p160
      // Predicated region
      $region29: #{tpu_custom_call.1} parent=5 // pred_check
        _
      $region30: #{tpu_custom_call.1} parent=5 // pred_check_branch
        %163 = sbr.rel (%p160) target = $region32
      $region31: #{tpu_custom_call.1} parent=5 // pred_region
        %s164 = ssub.s32 %s13, 1
        // Predicated region
        $region33: #{tpu_custom_call.1} parent=31 // pred_check
          %p165 = pneg %p86
        $region34: #{tpu_custom_call.1} parent=31 // pred_check_branch
          %167 = sbr.rel (%p165) target = $region36
        $region35: #{tpu_custom_call.1} parent=31 // pred_region
          %168 = dma.done [#allocation3], 2048
        $region36: #{tpu_custom_call.1} parent=31 // pred_fallthru
          _
        %p169 = scmp.lt.s32.totalorder %s18, 1
        %s170 = scalar_select %p169, %s18, 1
        %s171 = smul.addr %s170, 8
        %s172 = scalar_lea.vmem %s0, %s171
        %p173 = pneg %p39
        %p174 = pneg %p36
        %p175 = scmp.lt.s32.totalorder %s18, 1
        %s176 = scalar_select %p175, %s18, 1
        %s177 = smul.addr %s176, 8
        %s178 = scalar_lea.vmem %s1, %s177
        %p179 = pneg %p65
        %p180 = pneg %p62
        %p181 = pneg %p86
        %p182 = pneg %p83
        %p183 = pneg %p112
        %p184 = pneg %p109
        %s185 = sand.u32 %s99, 1
        %s186 = scalar_lea.sflag [#allocation4], %s185
        %s187 = sand.u32 %s99, 1
        %s188 = smul.addr %s187, 8
        %s189 = scalar_lea.vmem [#allocation5], %s188
        %p190 = scmp.lt.s32.totalorder %s18, 1
        %s191 = scalar_select %p190, %s18, 1
        %s192 = smul.addr %s191, 8
        %s193 = scalar_lea.vmem %s0, %s192
        %p194 = scmp.lt.s32.totalorder %s18, 1
        %s195 = scalar_select %p194, %s18, 1
        %s196 = smul.addr %s195, 8
        %s197 = scalar_lea.vmem %s1, %s196
        %v198 = vld [vmem:[%s193] sm:$0xff]
        %v199 = vlaneseq
        %v200 = vand.u32 %v199, 127
        %201 = vset.pattern.permute.xlu0 0
        %202 = vperm.xlu0 %201, %v198
        %v203 = vpop.permute.xlu0 %202
        %vm204 = vcmp.eq.s32.totalorder %v200, %v203
        %v205 = vld [vmem:[%s197] sm:$0xff]
        %207 = vset.pattern.permute.xlu0 0
        %208 = vperm.xlu0 %207, %v205
        %v209 = vpop.permute.xlu0 %208
        %v211 = vsel %vm204, %v209, 0.0
        %v212 = vld [vmem:[#allocation2] sm:$0xff]
        %v213 = vld [vmem:[#allocation2 + $0x8] sm:$0xff]
        %v214 = vld [vmem:[#allocation2 + $0x10] sm:$0xff]
        %v215 = vld [vmem:[#allocation2 + $0x18] sm:$0xff]
        %v216 = vld [vmem:[#allocation2 + $0x20] sm:$0xff]
        %v217 = vld [vmem:[#allocation2 + $0x28] sm:$0xff]
        %v218 = vld [vmem:[#allocation2 + $0x30] sm:$0xff]
        %v219 = vld [vmem:[#allocation2 + $0x38] sm:$0xff]
        %v220 = vld [vmem:[#allocation2 + $0x40] sm:$0xff]
        %v221 = vld [vmem:[#allocation2 + $0x48] sm:$0xff]
        %v222 = vld [vmem:[#allocation2 + $0x50] sm:$0xff]
        %v223 = vld [vmem:[#allocation2 + $0x58] sm:$0xff]
        %v224 = vld [vmem:[#allocation2 + $0x60] sm:$0xff]
        %v225 = vld [vmem:[#allocation2 + $0x68] sm:$0xff]
        %v226 = vld [vmem:[#allocation2 + $0x70] sm:$0xff]
        %v227 = vld [vmem:[#allocation2 + $0x78] sm:$0xff]
        %228 = vmatprep.subr.mxu0 0.0
        %v229 = vand.u32 %v227, 4294901760
        %230 = vmatpush1.msra.mxu0 %v229
        %231 = vmatprep.subr.mxu0 0.0
        %v232 = vand.u32 %v226, 4294901760
        %233 = vmatpush1.msra.mxu0 %v232
        %234 = vmatprep.subr.mxu0 0.0
        %v235 = vand.u32 %v225, 4294901760
        %236 = vmatpush1.msra.mxu0 %v235
        %237 = vmatprep.subr.mxu0 0.0
        %v238 = vand.u32 %v224, 4294901760
        %239 = vmatpush1.msra.mxu0 %v238
        %240 = vmatprep.subr.mxu0 0.0
        %v241 = vand.u32 %v223, 4294901760
        %242 = vmatpush1.msra.mxu0 %v241
        %243 = vmatprep.subr.mxu0 0.0
        %v244 = vand.u32 %v222, 4294901760
        %245 = vmatpush1.msra.mxu0 %v244
        %246 = vmatprep.subr.mxu0 0.0
        %v247 = vand.u32 %v221, 4294901760
        %248 = vmatpush1.msra.mxu0 %v247
        %249 = vmatprep.subr.mxu0 0.0
        %v250 = vand.u32 %v220, 4294901760
        %251 = vmatpush1.msra.mxu0 %v250
        %252 = vmatprep.subr.mxu0 0.0
        %v253 = vand.u32 %v219, 4294901760
        %254 = vmatpush1.msra.mxu0 %v253
        %255 = vmatprep.subr.mxu0 0.0
        %v256 = vand.u32 %v218, 4294901760
        %257 = vmatpush1.msra.mxu0 %v256
        %258 = vmatprep.subr.mxu0 0.0
        %v259 = vand.u32 %v217, 4294901760
        %260 = vmatpush1.msra.mxu0 %v259
        %261 = vmatprep.subr.mxu0 0.0
        %v262 = vand.u32 %v216, 4294901760
        %263 = vmatpush1.msra.mxu0 %v262
        %264 = vmatprep.subr.mxu0 0.0
        %v265 = vand.u32 %v215, 4294901760
        %266 = vmatpush1.msra.mxu0 %v265
        %267 = vmatprep.subr.mxu0 0.0
        %v268 = vand.u32 %v214, 4294901760
        %269 = vmatpush1.msra.mxu0 %v268
        %270 = vmatprep.subr.mxu0 0.0
        %v271 = vand.u32 %v213, 4294901760
        %272 = vmatpush1.msra.mxu0 %v271
        %273 = vmatprep.subr.mxu0 0.0
        %v274 = vand.u32 %v212, 4294901760
        %275 = vmatpush1.msra.mxu0 %v274
        %276 = vmatprep.subr.mxu0 0.0
        %277 = vmatpush2.msra.mxu0 0.0
        %278 = vmatprep.subr.mxu0 0.0
        %279 = vmatpush2.msra.mxu0 0.0
        %280 = vmatprep.subr.mxu0 0.0
        %281 = vmatpush2.msra.mxu0 0.0
        %282 = vmatprep.subr.mxu0 0.0
        %283 = vmatpush2.msra.mxu0 0.0
        %284 = vmatprep.subr.mxu0 0.0
        %285 = vmatpush2.msra.mxu0 0.0
        %286 = vmatprep.subr.mxu0 0.0
        %287 = vmatpush2.msra.mxu0 0.0
        %288 = vmatprep.subr.mxu0 0.0
        %289 = vmatpush2.msra.mxu0 0.0
        %290 = vmatprep.subr.mxu0 0.0
        %291 = vmatpush2.msra.mxu0 0.0
        %292 = vmatprep.subr.mxu0 0.0
        %293 = vmatpush2.msra.mxu0 0.0
        %294 = vmatprep.subr.mxu0 0.0
        %295 = vmatpush2.msra.mxu0 0.0
        %296 = vmatprep.subr.mxu0 0.0
        %297 = vmatpush2.msra.mxu0 0.0
        %298 = vmatprep.subr.mxu0 0.0
        %299 = vmatpush2.msra.mxu0 0.0
        %300 = vmatprep.subr.mxu0 0.0
        %301 = vmatpush2.msra.mxu0 0.0
        %302 = vmatprep.subr.mxu0 0.0
        %303 = vmatpush2.msra.mxu0 0.0
        %304 = vmatprep.subr.mxu0 0.0
        %305 = vmatpush2.msra.mxu0 0.0
        %306 = vmatprep.subr.mxu0 0.0
        %307 = vmatpush2.msra.mxu0 0.0
        %308 = vmatprep.mubr.f32.mxu0 0.0
        %v309 = vand.u32 %v211, 4294901760
        %v310 = vsub.f32 %v211, %v309
        %v311 = vand.u32 %v310, 4294901760
        %v312 = vsub.f32 %v310, %v311
        %v313 = vand.u32 %v312, 4294901760
        %314 = vmatmul.mubr.f32.gmra.mxu0 %v313
        %v315 = vpop.f32.mrf.mxu0
        %v316 = vadd.f32 0.0, %v315
        %v317 = vpop.f32.mrf.mxu0
        %318 = vdwg.mxu0
        %319 = vmatprep.subr.mxu0 0.0
        %v320 = vand.u32 %v227, 4294901760
        %v321 = vsub.f32 %v227, %v320
        %v322 = vand.u32 %v321, 4294901760
        %v323 = vsub.f32 %v321, %v322
        %v324 = vand.u32 %v323, 4294901760
        %325 = vmatpush1.msra.mxu0 %v324
        %326 = vmatprep.subr.mxu0 0.0
        %v327 = vand.u32 %v226, 4294901760
        %v328 = vsub.f32 %v226, %v327
        %v329 = vand.u32 %v328, 4294901760
        %v330 = vsub.f32 %v328, %v329
        %v331 = vand.u32 %v330, 4294901760
        %332 = vmatpush1.msra.mxu0 %v331
        %333 = vmatprep.subr.mxu0 0.0
        %v334 = vand.u32 %v225, 4294901760
        %v335 = vsub.f32 %v225, %v334
        %v336 = vand.u32 %v335, 4294901760
        %v337 = vsub.f32 %v335, %v336
        %v338 = vand.u32 %v337, 4294901760
        %339 = vmatpush1.msra.mxu0 %v338
        %340 = vmatprep.subr.mxu0 0.0
        %v341 = vand.u32 %v224, 4294901760
        %v342 = vsub.f32 %v224, %v341
        %v343 = vand.u32 %v342, 4294901760
        %v344 = vsub.f32 %v342, %v343
        %v345 = vand.u32 %v344, 4294901760
        %346 = vmatpush1.msra.mxu0 %v345
        %347 = vmatprep.subr.mxu0 0.0
        %v348 = vand.u32 %v223, 4294901760
        %v349 = vsub.f32 %v223, %v348
        %v350 = vand.u32 %v349, 4294901760
        %v351 = vsub.f32 %v349, %v350
        %v352 = vand.u32 %v351, 4294901760
        %353 = vmatpush1.msra.mxu0 %v352
        %354 = vmatprep.subr.mxu0 0.0
        %v355 = vand.u32 %v222, 4294901760
        %v356 = vsub.f32 %v222, %v355
        %v357 = vand.u32 %v356, 4294901760
        %v358 = vsub.f32 %v356, %v357
        %v359 = vand.u32 %v358, 4294901760
        %360 = vmatpush1.msra.mxu0 %v359
        %361 = vmatprep.subr.mxu0 0.0
        %v362 = vand.u32 %v221, 4294901760
        %v363 = vsub.f32 %v221, %v362
        %v364 = vand.u32 %v363, 4294901760
        %v365 = vsub.f32 %v363, %v364
        %v366 = vand.u32 %v365, 4294901760
        %367 = vmatpush1.msra.mxu0 %v366
        %368 = vmatprep.subr.mxu0 0.0
        %v369 = vand.u32 %v220, 4294901760
        %v370 = vsub.f32 %v220, %v369
        %v371 = vand.u32 %v370, 4294901760
        %v372 = vsub.f32 %v370, %v371
        %v373 = vand.u32 %v372, 4294901760
        %374 = vmatpush1.msra.mxu0 %v373
        %375 = vmatprep.subr.mxu0 0.0
        %v376 = vand.u32 %v219, 4294901760
        %v377 = vsub.f32 %v219, %v376
        %v378 = vand.u32 %v377, 4294901760
        %v379 = vsub.f32 %v377, %v378
        %v380 = vand.u32 %v379, 4294901760
        %381 = vmatpush1.msra.mxu0 %v380
        %382 = vmatprep.subr.mxu0 0.0
        %v383 = vand.u32 %v218, 4294901760
        %v384 = vsub.f32 %v218, %v383
        %v385 = vand.u32 %v384, 4294901760
        %v386 = vsub.f32 %v384, %v385
        %v387 = vand.u32 %v386, 4294901760
        %388 = vmatpush1.msra.mxu0 %v387
        %389 = vmatprep.subr.mxu0 0.0
        %v390 = vand.u32 %v217, 4294901760
        %v391 = vsub.f32 %v217, %v390
        %v392 = vand.u32 %v391, 4294901760
        %v393 = vsub.f32 %v391, %v392
        %v394 = vand.u32 %v393, 4294901760
        %395 = vmatpush1.msra.mxu0 %v394
        %396 = vmatprep.subr.mxu0 0.0
        %v397 = vand.u32 %v216, 4294901760
        %v398 = vsub.f32 %v216, %v397
        %v399 = vand.u32 %v398, 4294901760
        %v400 = vsub.f32 %v398, %v399
        %v401 = vand.u32 %v400, 4294901760
        %402 = vmatpush1.msra.mxu0 %v401
        %403 = vmatprep.subr.mxu0 0.0
        %v404 = vand.u32 %v215, 4294901760
        %v405 = vsub.f32 %v215, %v404
        %v406 = vand.u32 %v405, 4294901760
        %v407 = vsub.f32 %v405, %v406
        %v408 = vand.u32 %v407, 4294901760
        %409 = vmatpush1.msra.mxu0 %v408
        %410 = vmatprep.subr.mxu0 0.0
        %v411 = vand.u32 %v214, 4294901760
        %v412 = vsub.f32 %v214, %v411
        %v413 = vand.u32 %v412, 4294901760
        %v414 = vsub.f32 %v412, %v413
        %v415 = vand.u32 %v414, 4294901760
        %416 = vmatpush1.msra.mxu0 %v415
        %417 = vmatprep.subr.mxu0 0.0
        %v418 = vand.u32 %v213, 4294901760
        %v419 = vsub.f32 %v213, %v418
        %v420 = vand.u32 %v419, 4294901760
        %v421 = vsub.f32 %v419, %v420
        %v422 = vand.u32 %v421, 4294901760
        %423 = vmatpush1.msra.mxu0 %v422
        %424 = vmatprep.subr.mxu0 0.0
        %v425 = vand.u32 %v212, 4294901760
        %v426 = vsub.f32 %v212, %v425
        %v427 = vand.u32 %v426, 4294901760
        %v428 = vsub.f32 %v426, %v427
        %v429 = vand.u32 %v428, 4294901760
        %430 = vmatpush1.msra.mxu0 %v429
        %431 = vmatprep.subr.mxu0 0.0
        %432 = vmatpush2.msra.mxu0 0.0
        %433 = vmatprep.subr.mxu0 0.0
        %434 = vmatpush2.msra.mxu0 0.0
        %435 = vmatprep.subr.mxu0 0.0
        %436 = vmatpush2.msra.mxu0 0.0
        %437 = vmatprep.subr.mxu0 0.0
        %438 = vmatpush2.msra.mxu0 0.0
        %439 = vmatprep.subr.mxu0 0.0
        %440 = vmatpush2.msra.mxu0 0.0
        %441 = vmatprep.subr.mxu0 0.0
        %442 = vmatpush2.msra.mxu0 0.0
        %443 = vmatprep.subr.mxu0 0.0
        %444 = vmatpush2.msra.mxu0 0.0
        %445 = vmatprep.subr.mxu0 0.0
        %446 = vmatpush2.msra.mxu0 0.0
        %447 = vmatprep.subr.mxu0 0.0
        %448 = vmatpush2.msra.mxu0 0.0
        %449 = vmatprep.subr.mxu0 0.0
        %450 = vmatpush2.msra.mxu0 0.0
        %451 = vmatprep.subr.mxu0 0.0
        %452 = vmatpush2.msra.mxu0 0.0
        %453 = vmatprep.subr.mxu0 0.0
        %454 = vmatpush2.msra.mxu0 0.0
        %455 = vmatprep.subr.mxu0 0.0
        %456 = vmatpush2.msra.mxu0 0.0
        %457 = vmatprep.subr.mxu0 0.0
        %458 = vmatpush2.msra.mxu0 0.0
        %459 = vmatprep.subr.mxu0 0.0
        %460 = vmatpush2.msra.mxu0 0.0
        %461 = vmatprep.subr.mxu0 0.0
        %462 = vmatpush2.msra.mxu0 0.0
        %463 = vmatprep.mubr.f32.mxu0 0.0
        %v464 = vand.u32 %v211, 4294901760
        %465 = vmatmul.mubr.f32.gmra.mxu0 %v464
        %v466 = vpop.f32.mrf.mxu0
        %v467 = vadd.f32 %v316, %v466
        %v468 = vpop.f32.mrf.mxu0
        %469 = vdwg.mxu0
        %470 = vmatprep.subr.mxu0 0.0
        %v471 = vand.u32 %v227, 4294901760
        %v472 = vsub.f32 %v227, %v471
        %473 = vmatpush1.msra.mxu0 %v472
        %474 = vmatprep.subr.mxu0 0.0
        %v475 = vand.u32 %v226, 4294901760
        %v476 = vsub.f32 %v226, %v475
        %477 = vmatpush1.msra.mxu0 %v476
        %478 = vmatprep.subr.mxu0 0.0
        %v479 = vand.u32 %v225, 4294901760
        %v480 = vsub.f32 %v225, %v479
        %481 = vmatpush1.msra.mxu0 %v480
        %482 = vmatprep.subr.mxu0 0.0
        %v483 = vand.u32 %v224, 4294901760
        %v484 = vsub.f32 %v224, %v483
        %485 = vmatpush1.msra.mxu0 %v484
        %486 = vmatprep.subr.mxu0 0.0
        %v487 = vand.u32 %v223, 4294901760
        %v488 = vsub.f32 %v223, %v487
        %489 = vmatpush1.msra.mxu0 %v488
        %490 = vmatprep.subr.mxu0 0.0
        %v491 = vand.u32 %v222, 4294901760
        %v492 = vsub.f32 %v222, %v491
        %493 = vmatpush1.msra.mxu0 %v492
        %494 = vmatprep.subr.mxu0 0.0
        %v495 = vand.u32 %v221, 4294901760
        %v496 = vsub.f32 %v221, %v495
        %497 = vmatpush1.msra.mxu0 %v496
        %498 = vmatprep.subr.mxu0 0.0
        %v499 = vand.u32 %v220, 4294901760
        %v500 = vsub.f32 %v220, %v499
        %501 = vmatpush1.msra.mxu0 %v500
        %502 = vmatprep.subr.mxu0 0.0
        %v503 = vand.u32 %v219, 4294901760
        %v504 = vsub.f32 %v219, %v503
        %505 = vmatpush1.msra.mxu0 %v504
        %506 = vmatprep.subr.mxu0 0.0
        %v507 = vand.u32 %v218, 4294901760
        %v508 = vsub.f32 %v218, %v507
        %509 = vmatpush1.msra.mxu0 %v508
        %510 = vmatprep.subr.mxu0 0.0
        %v511 = vand.u32 %v217, 4294901760
        %v512 = vsub.f32 %v217, %v511
        %513 = vmatpush1.msra.mxu0 %v512
        %514 = vmatprep.subr.mxu0 0.0
        %v515 = vand.u32 %v216, 4294901760
        %v516 = vsub.f32 %v216, %v515
        %517 = vmatpush1.msra.mxu0 %v516
        %518 = vmatprep.subr.mxu0 0.0
        %v519 = vand.u32 %v215, 4294901760
        %v520 = vsub.f32 %v215, %v519
        %521 = vmatpush1.msra.mxu0 %v520
        %522 = vmatprep.subr.mxu0 0.0
        %v523 = vand.u32 %v214, 4294901760
        %v524 = vsub.f32 %v214, %v523
        %525 = vmatpush1.msra.mxu0 %v524
        %526 = vmatprep.subr.mxu0 0.0
        %v527 = vand.u32 %v213, 4294901760
        %v528 = vsub.f32 %v213, %v527
        %529 = vmatpush1.msra.mxu0 %v528
        %530 = vmatprep.subr.mxu0 0.0
        %v531 = vand.u32 %v212, 4294901760
        %v532 = vsub.f32 %v212, %v531
        %533 = vmatpush1.msra.mxu0 %v532
        %534 = vmatprep.subr.mxu0 0.0
        %535 = vmatpush2.msra.mxu0 0.0
        %536 = vmatprep.subr.mxu0 0.0
        %537 = vmatpush2.msra.mxu0 0.0
        %538 = vmatprep.subr.mxu0 0.0
        %539 = vmatpush2.msra.mxu0 0.0
        %540 = vmatprep.subr.mxu0 0.0
        %541 = vmatpush2.msra.mxu0 0.0
        %542 = vmatprep.subr.mxu0 0.0
        %543 = vmatpush2.msra.mxu0 0.0
        %544 = vmatprep.subr.mxu0 0.0
        %545 = vmatpush2.msra.mxu0 0.0
        %546 = vmatprep.subr.mxu0 0.0
        %547 = vmatpush2.msra.mxu0 0.0
        %548 = vmatprep.subr.mxu0 0.0
        %549 = vmatpush2.msra.mxu0 0.0
        %550 = vmatprep.subr.mxu0 0.0
        %551 = vmatpush2.msra.mxu0 0.0
        %552 = vmatprep.subr.mxu0 0.0
        %553 = vmatpush2.msra.mxu0 0.0
        %554 = vmatprep.subr.mxu0 0.0
        %555 = vmatpush2.msra.mxu0 0.0
        %556 = vmatprep.subr.mxu0 0.0
        %557 = vmatpush2.msra.mxu0 0.0
        %558 = vmatprep.subr.mxu0 0.0
        %559 = vmatpush2.msra.mxu0 0.0
        %560 = vmatprep.subr.mxu0 0.0
        %561 = vmatpush2.msra.mxu0 0.0
        %562 = vmatprep.subr.mxu0 0.0
        %563 = vmatpush2.msra.mxu0 0.0
        %564 = vmatprep.subr.mxu0 0.0
        %565 = vmatpush2.msra.mxu0 0.0
        %566 = vmatprep.mubr.f32.mxu0 0.0
        %v567 = vand.u32 %v211, 4294901760
        %v568 = vsub.f32 %v211, %v567
        %569 = vmatmul.mubr.f32.gmra.mxu0 %v568
        %v570 = vpop.f32.mrf.mxu0
        %v571 = vadd.f32 %v467, %v570
        %v572 = vpop.f32.mrf.mxu0
        %573 = vdwg.mxu0
        %574 = vmatprep.subr.mxu0 0.0
        %v575 = vand.u32 %v227, 4294901760
        %576 = vmatpush1.msra.mxu0 %v575
        %577 = vmatprep.subr.mxu0 0.0
        %v578 = vand.u32 %v226, 4294901760
        %579 = vmatpush1.msra.mxu0 %v578
        %580 = vmatprep.subr.mxu0 0.0
        %v581 = vand.u32 %v225, 4294901760
        %582 = vmatpush1.msra.mxu0 %v581
        %583 = vmatprep.subr.mxu0 0.0
        %v584 = vand.u32 %v224, 4294901760
        %585 = vmatpush1.msra.mxu0 %v584
        %586 = vmatprep.subr.mxu0 0.0
        %v587 = vand.u32 %v223, 4294901760
        %588 = vmatpush1.msra.mxu0 %v587
        %589 = vmatprep.subr.mxu0 0.0
        %v590 = vand.u32 %v222, 4294901760
        %591 = vmatpush1.msra.mxu0 %v590
        %592 = vmatprep.subr.mxu0 0.0
        %v593 = vand.u32 %v221, 4294901760
        %594 = vmatpush1.msra.mxu0 %v593
        %595 = vmatprep.subr.mxu0 0.0
        %v596 = vand.u32 %v220, 4294901760
        %597 = vmatpush1.msra.mxu0 %v596
        %598 = vmatprep.subr.mxu0 0.0
        %v599 = vand.u32 %v219, 4294901760
        %600 = vmatpush1.msra.mxu0 %v599
        %601 = vmatprep.subr.mxu0 0.0
        %v602 = vand.u32 %v218, 4294901760
        %603 = vmatpush1.msra.mxu0 %v602
        %604 = vmatprep.subr.mxu0 0.0
        %v605 = vand.u32 %v217, 4294901760
        %606 = vmatpush1.msra.mxu0 %v605
        %607 = vmatprep.subr.mxu0 0.0
        %v608 = vand.u32 %v216, 4294901760
        %609 = vmatpush1.msra.mxu0 %v608
        %610 = vmatprep.subr.mxu0 0.0
        %v611 = vand.u32 %v215, 4294901760
        %612 = vmatpush1.msra.mxu0 %v611
        %613 = vmatprep.subr.mxu0 0.0
        %v614 = vand.u32 %v214, 4294901760
        %615 = vmatpush1.msra.mxu0 %v614
        %616 = vmatprep.subr.mxu0 0.0
        %v617 = vand.u32 %v213, 4294901760
        %618 = vmatpush1.msra.mxu0 %v617
        %619 = vmatprep.subr.mxu0 0.0
        %v620 = vand.u32 %v212, 4294901760
        %621 = vmatpush1.msra.mxu0 %v620
        %622 = vmatprep.subr.mxu0 0.0
        %623 = vmatpush2.msra.mxu0 0.0
        %624 = vmatprep.subr.mxu0 0.0
        %625 = vmatpush2.msra.mxu0 0.0
        %626 = vmatprep.subr.mxu0 0.0
        %627 = vmatpush2.msra.mxu0 0.0
        %628 = vmatprep.subr.mxu0 0.0
        %629 = vmatpush2.msra.mxu0 0.0
        %630 = vmatprep.subr.mxu0 0.0
        %631 = vmatpush2.msra.mxu0 0.0
        %632 = vmatprep.subr.mxu0 0.0
        %633 = vmatpush2.msra.mxu0 0.0
        %634 = vmatprep.subr.mxu0 0.0
        %635 = vmatpush2.msra.mxu0 0.0
        %636 = vmatprep.subr.mxu0 0.0
        %637 = vmatpush2.msra.mxu0 0.0
        %638 = vmatprep.subr.mxu0 0.0
        %639 = vmatpush2.msra.mxu0 0.0
        %640 = vmatprep.subr.mxu0 0.0
        %641 = vmatpush2.msra.mxu0 0.0
        %642 = vmatprep.subr.mxu0 0.0
        %643 = vmatpush2.msra.mxu0 0.0
        %644 = vmatprep.subr.mxu0 0.0
        %645 = vmatpush2.msra.mxu0 0.0
        %646 = vmatprep.subr.mxu0 0.0
        %647 = vmatpush2.msra.mxu0 0.0
        %648 = vmatprep.subr.mxu0 0.0
        %649 = vmatpush2.msra.mxu0 0.0
        %650 = vmatprep.subr.mxu0 0.0
        %651 = vmatpush2.msra.mxu0 0.0
        %652 = vmatprep.subr.mxu0 0.0
        %653 = vmatpush2.msra.mxu0 0.0
        %654 = vmatprep.mubr.f32.mxu0 0.0
        %v655 = vand.u32 %v211, 4294901760
        %v656 = vsub.f32 %v211, %v655
        %v657 = vand.u32 %v656, 4294901760
        %658 = vmatmul.mubr.f32.gmra.mxu0 %v657
        %v659 = vpop.f32.mrf.mxu0
        %v660 = vadd.f32 %v571, %v659
        %v661 = vpop.f32.mrf.mxu0
        %662 = vdwg.mxu0
        %663 = vmatprep.subr.mxu0 0.0
        %v664 = vand.u32 %v227, 4294901760
        %v665 = vsub.f32 %v227, %v664
        %v666 = vand.u32 %v665, 4294901760
        %667 = vmatpush1.msra.mxu0 %v666
        %668 = vmatprep.subr.mxu0 0.0
        %v669 = vand.u32 %v226, 4294901760
        %v670 = vsub.f32 %v226, %v669
        %v671 = vand.u32 %v670, 4294901760
        %672 = vmatpush1.msra.mxu0 %v671
        %673 = vmatprep.subr.mxu0 0.0
        %v674 = vand.u32 %v225, 4294901760
        %v675 = vsub.f32 %v225, %v674
        %v676 = vand.u32 %v675, 4294901760
        %677 = vmatpush1.msra.mxu0 %v676
        %678 = vmatprep.subr.mxu0 0.0
        %v679 = vand.u32 %v224, 4294901760
        %v680 = vsub.f32 %v224, %v679
        %v681 = vand.u32 %v680, 4294901760
        %682 = vmatpush1.msra.mxu0 %v681
        %683 = vmatprep.subr.mxu0 0.0
        %v684 = vand.u32 %v223, 4294901760
        %v685 = vsub.f32 %v223, %v684
        %v686 = vand.u32 %v685, 4294901760
        %687 = vmatpush1.msra.mxu0 %v686
        %688 = vmatprep.subr.mxu0 0.0
        %v689 = vand.u32 %v222, 4294901760
        %v690 = vsub.f32 %v222, %v689
        %v691 = vand.u32 %v690, 4294901760
        %692 = vmatpush1.msra.mxu0 %v691
        %693 = vmatprep.subr.mxu0 0.0
        %v694 = vand.u32 %v221, 4294901760
        %v695 = vsub.f32 %v221, %v694
        %v696 = vand.u32 %v695, 4294901760
        %697 = vmatpush1.msra.mxu0 %v696
        %698 = vmatprep.subr.mxu0 0.0
        %v699 = vand.u32 %v220, 4294901760
        %v700 = vsub.f32 %v220, %v699
        %v701 = vand.u32 %v700, 4294901760
        %702 = vmatpush1.msra.mxu0 %v701
        %703 = vmatprep.subr.mxu0 0.0
        %v704 = vand.u32 %v219, 4294901760
        %v705 = vsub.f32 %v219, %v704
        %v706 = vand.u32 %v705, 4294901760
        %707 = vmatpush1.msra.mxu0 %v706
        %708 = vmatprep.subr.mxu0 0.0
        %v709 = vand.u32 %v218, 4294901760
        %v710 = vsub.f32 %v218, %v709
        %v711 = vand.u32 %v710, 4294901760
        %712 = vmatpush1.msra.mxu0 %v711
        %713 = vmatprep.subr.mxu0 0.0
        %v714 = vand.u32 %v217, 4294901760
        %v715 = vsub.f32 %v217, %v714
        %v716 = vand.u32 %v715, 4294901760
        %717 = vmatpush1.msra.mxu0 %v716
        %718 = vmatprep.subr.mxu0 0.0
        %v719 = vand.u32 %v216, 4294901760
        %v720 = vsub.f32 %v216, %v719
        %v721 = vand.u32 %v720, 4294901760
        %722 = vmatpush1.msra.mxu0 %v721
        %723 = vmatprep.subr.mxu0 0.0
        %v724 = vand.u32 %v215, 4294901760
        %v725 = vsub.f32 %v215, %v724
        %v726 = vand.u32 %v725, 4294901760
        %727 = vmatpush1.msra.mxu0 %v726
        %728 = vmatprep.subr.mxu0 0.0
        %v729 = vand.u32 %v214, 4294901760
        %v730 = vsub.f32 %v214, %v729
        %v731 = vand.u32 %v730, 4294901760
        %732 = vmatpush1.msra.mxu0 %v731
        %733 = vmatprep.subr.mxu0 0.0
        %v734 = vand.u32 %v213, 4294901760
        %v735 = vsub.f32 %v213, %v734
        %v736 = vand.u32 %v735, 4294901760
        %737 = vmatpush1.msra.mxu0 %v736
        %738 = vmatprep.subr.mxu0 0.0
        %v739 = vand.u32 %v212, 4294901760
        %v740 = vsub.f32 %v212, %v739
        %v741 = vand.u32 %v740, 4294901760
        %742 = vmatpush1.msra.mxu0 %v741
        %743 = vmatprep.subr.mxu0 0.0
        %744 = vmatpush2.msra.mxu0 0.0
        %745 = vmatprep.subr.mxu0 0.0
        %746 = vmatpush2.msra.mxu0 0.0
        %747 = vmatprep.subr.mxu0 0.0
        %748 = vmatpush2.msra.mxu0 0.0
        %749 = vmatprep.subr.mxu0 0.0
        %750 = vmatpush2.msra.mxu0 0.0
        %751 = vmatprep.subr.mxu0 0.0
        %752 = vmatpush2.msra.mxu0 0.0
        %753 = vmatprep.subr.mxu0 0.0
        %754 = vmatpush2.msra.mxu0 0.0
        %755 = vmatprep.subr.mxu0 0.0
        %756 = vmatpush2.msra.mxu0 0.0
        %757 = vmatprep.subr.mxu0 0.0
        %758 = vmatpush2.msra.mxu0 0.0
        %759 = vmatprep.subr.mxu0 0.0
        %760 = vmatpush2.msra.mxu0 0.0
        %761 = vmatprep.subr.mxu0 0.0
        %762 = vmatpush2.msra.mxu0 0.0
        %763 = vmatprep.subr.mxu0 0.0
        %764 = vmatpush2.msra.mxu0 0.0
        %765 = vmatprep.subr.mxu0 0.0
        %766 = vmatpush2.msra.mxu0 0.0
        %767 = vmatprep.subr.mxu0 0.0
        %768 = vmatpush2.msra.mxu0 0.0
        %769 = vmatprep.subr.mxu0 0.0
        %770 = vmatpush2.msra.mxu0 0.0
        %771 = vmatprep.subr.mxu0 0.0
        %772 = vmatpush2.msra.mxu0 0.0
        %773 = vmatprep.subr.mxu0 0.0
        %774 = vmatpush2.msra.mxu0 0.0
        %775 = vmatprep.mubr.f32.mxu0 0.0
        %v776 = vand.u32 %v211, 4294901760
        %777 = vmatmul.mubr.f32.gmra.mxu0 %v776
        %v778 = vpop.f32.mrf.mxu0
        %v779 = vadd.f32 %v660, %v778
        %v780 = vpop.f32.mrf.mxu0
        %781 = vdwg.mxu0
        %782 = vmatprep.subr.mxu0 0.0
        %v783 = vand.u32 %v227, 4294901760
        %784 = vmatpush1.msra.mxu0 %v783
        %785 = vmatprep.subr.mxu0 0.0
        %v786 = vand.u32 %v226, 4294901760
        %787 = vmatpush1.msra.mxu0 %v786
        %788 = vmatprep.subr.mxu0 0.0
        %v789 = vand.u32 %v225, 4294901760
        %790 = vmatpush1.msra.mxu0 %v789
        %791 = vmatprep.subr.mxu0 0.0
        %v792 = vand.u32 %v224, 4294901760
        %793 = vmatpush1.msra.mxu0 %v792
        %794 = vmatprep.subr.mxu0 0.0
        %v795 = vand.u32 %v223, 4294901760
        %796 = vmatpush1.msra.mxu0 %v795
        %797 = vmatprep.subr.mxu0 0.0
        %v798 = vand.u32 %v222, 4294901760
        %799 = vmatpush1.msra.mxu0 %v798
        %800 = vmatprep.subr.mxu0 0.0
        %v801 = vand.u32 %v221, 4294901760
        %802 = vmatpush1.msra.mxu0 %v801
        %803 = vmatprep.subr.mxu0 0.0
        %v804 = vand.u32 %v220, 4294901760
        %805 = vmatpush1.msra.mxu0 %v804
        %806 = vmatprep.subr.mxu0 0.0
        %v807 = vand.u32 %v219, 4294901760
        %808 = vmatpush1.msra.mxu0 %v807
        %809 = vmatprep.subr.mxu0 0.0
        %v810 = vand.u32 %v218, 4294901760
        %811 = vmatpush1.msra.mxu0 %v810
        %812 = vmatprep.subr.mxu0 0.0
        %v813 = vand.u32 %v217, 4294901760
        %814 = vmatpush1.msra.mxu0 %v813
        %815 = vmatprep.subr.mxu0 0.0
        %v816 = vand.u32 %v216, 4294901760
        %817 = vmatpush1.msra.mxu0 %v816
        %818 = vmatprep.subr.mxu0 0.0
        %v819 = vand.u32 %v215, 4294901760
        %820 = vmatpush1.msra.mxu0 %v819
        %821 = vmatprep.subr.mxu0 0.0
        %v822 = vand.u32 %v214, 4294901760
        %823 = vmatpush1.msra.mxu0 %v822
        %824 = vmatprep.subr.mxu0 0.0
        %v825 = vand.u32 %v213, 4294901760
        %826 = vmatpush1.msra.mxu0 %v825
        %827 = vmatprep.subr.mxu0 0.0
        %v828 = vand.u32 %v212, 4294901760
        %829 = vmatpush1.msra.mxu0 %v828
        %830 = vmatprep.subr.mxu0 0.0
        %831 = vmatpush2.msra.mxu0 0.0
        %832 = vmatprep.subr.mxu0 0.0
        %833 = vmatpush2.msra.mxu0 0.0
        %834 = vmatprep.subr.mxu0 0.0
        %835 = vmatpush2.msra.mxu0 0.0
        %836 = vmatprep.subr.mxu0 0.0
        %837 = vmatpush2.msra.mxu0 0.0
        %838 = vmatprep.subr.mxu0 0.0
        %839 = vmatpush2.msra.mxu0 0.0
        %840 = vmatprep.subr.mxu0 0.0
        %841 = vmatpush2.msra.mxu0 0.0
        %842 = vmatprep.subr.mxu0 0.0
        %843 = vmatpush2.msra.mxu0 0.0
        %844 = vmatprep.subr.mxu0 0.0
        %845 = vmatpush2.msra.mxu0 0.0
        %846 = vmatprep.subr.mxu0 0.0
        %847 = vmatpush2.msra.mxu0 0.0
        %848 = vmatprep.subr.mxu0 0.0
        %849 = vmatpush2.msra.mxu0 0.0
        %850 = vmatprep.subr.mxu0 0.0
        %851 = vmatpush2.msra.mxu0 0.0
        %852 = vmatprep.subr.mxu0 0.0
        %853 = vmatpush2.msra.mxu0 0.0
        %854 = vmatprep.subr.mxu0 0.0
        %855 = vmatpush2.msra.mxu0 0.0
        %856 = vmatprep.subr.mxu0 0.0
        %857 = vmatpush2.msra.mxu0 0.0
        %858 = vmatprep.subr.mxu0 0.0
        %859 = vmatpush2.msra.mxu0 0.0
        %860 = vmatprep.subr.mxu0 0.0
        %861 = vmatpush2.msra.mxu0 0.0
        %862 = vmatprep.mubr.f32.mxu0 0.0
        %v863 = vand.u32 %v211, 4294901760
        %864 = vmatmul.mubr.f32.gmra.mxu0 %v863
        %v865 = vpop.f32.mrf.mxu0
        %v866 = vadd.f32 %v779, %v865
        %v867 = vpop.f32.mrf.mxu0
        %868 = vdwg.mxu0
        %869 = vst [vmem:[%s189] sm:$0xff] %v866
        %s870 = sand.u32 %s99, 1
        %s871 = scalar_lea.sflag [#allocation4], %s870
        %s872 = sand.u32 %s99, 1
        %s873 = smul.addr %s872, 8
        %s874 = scalar_lea.vmem [#allocation5], %s873
        // Predicated region
        $region37: #{tpu_custom_call.1} parent=31 // pred_check
          %p875 = pneg %p109
        $region38: #{tpu_custom_call.1} parent=31 // pred_check_branch
          %877 = sbr.rel (%p875) target = $region40
        $region39: #{tpu_custom_call.1} parent=31 // pred_region
          %s879 = ssub.s32 128, 128
          %880 = vsyncadd %s871, %s879
          %s881 = smul.addr %s18, 128
          %s882 = scalar_lea.hbm %s3, %s881
          %s884 = sshll.u32 %s874, 4
          %s885 = int_to_ptr.vmem [resolvable:$true] %s884
          %887 = dma.vmem_to_hbm [thread:$0]  %s885, 128, %s882, %s871
        $region40: #{tpu_custom_call.1} parent=31 // pred_fallthru
          _
      $region32: #{tpu_custom_call.1} parent=5 // pred_fallthru
        _
      %p888 = scmp.le.s32.totalorder 2, %s13
      // Predicated region
      $region41: #{tpu_custom_call.1} parent=5 // pred_check
        %p889 = pneg %p888
      $region42: #{tpu_custom_call.1} parent=5 // pred_check_branch
        %891 = sbr.rel (%p889) target = $region44
      $region43: #{tpu_custom_call.1} parent=5 // pred_region
        %s892 = ssub.s32 %s13, 2
        // Predicated region
        $region45: #{tpu_custom_call.1} parent=43 // pred_check
          %p893 = pneg %p115
        $region46: #{tpu_custom_call.1} parent=43 // pred_check_branch
          %895 = sbr.rel (%p893) target = $region48
        $region47: #{tpu_custom_call.1} parent=43 // pred_region
          %s896 = sand.u32 %s100, 1
          %s897 = scalar_lea.sflag [#allocation4], %s896
          %s898 = sand.u32 %s100, 1
          %s899 = smul.addr %s898, 8
          %s900 = scalar_lea.vmem [#allocation5], %s899
          %901 = dma.done %s897, 128
        $region48: #{tpu_custom_call.1} parent=43 // pred_fallthru
          _
      $region44: #{tpu_custom_call.1} parent=5 // pred_fallthru
        _
    $region6: #{tpu_custom_call.1} parent=1 // loop_footer
      %s17 = sadd.s32 1, %s13
    $region7: #{tpu_custom_call.1} parent=1 // loop_footer_branch
      %12 = sbr.rel target = $region3
    $region8: #{tpu_custom_call.1} parent=1 // loop_exit
      _
    %902 = vsyncpa [#allocation3], 1
    %s903 = scalar_lea.sflag [#allocation3], 1
    %904 = vsyncpa %s903, 1
    %905 = vsyncpa [#allocation4], 1
    %s906 = scalar_lea.sflag [#allocation4], 1
    %907 = vsyncpa %s906, 1

</llo_original>
